<compile_context>
chip_gen: v7x
topology: tpu7x:2x2x1
jax: 0.10.0
libtpu: 0.0.40
codegen_flags: <defaults>
</compile_context>

<pallas_src>
import functools

import jax
import jax.numpy as jnp
from jax.experimental import pallas as pl
from jax.experimental.pallas import tpu as pltpu


def _pool_branch_kernel(x_ref, w_ref, b_ref, mask_ref, o_ref, *, width, is_max):
    """Fused conv1x1 + folded-BN + ReLU + 3x3/s1/p1 pool for one image.

    x_ref:    (1, C_in, H*W)   image, spatial flattened on the lane axis
    w_ref:    (C_out, C_in)    conv weight with BN scale folded in
    b_ref:    (C_out, 1)       folded BN shift
    mask_ref: (9, H*W)         per-tap in-bounds masks (1.0 valid / 0.0 pad)
    o_ref:    (1, C_out, H*W)  output image
    """
    hw = x_ref.shape[2]
    c_out = w_ref.shape[0]
    # Halo on the flat spatial axis, rounded up to 128 so the concatenation
    # below happens at lane-aligned boundaries.
    pad = ((width + 1 + 127) // 128) * 128

    # ---- 1x1 conv (single fused MXU matmul) + folded BN + ReLU -------------
    x = x_ref[0]                                                  # (C_in, H*W)
    y = jnp.dot(w_ref[...], x, preferred_element_type=jnp.float32)
    y = jnp.maximum(y + b_ref[...], 0.0)                          # (C_out, H*W), >= 0

    # ---- 3x3, stride-1, pad-1 pooling on the flattened spatial axis --------
    # Neighbor (dh, dw) of flat position p is p + dh*W + dw.  Zero-pad the
    # flat axis, take 9 statically offset lane slices and zero out the
    # out-of-bounds taps with the precomputed masks.
    zpad = jnp.zeros((c_out, pad), jnp.float32)
    yp = jnp.concatenate([zpad, y, zpad], axis=1)                 # (C_out, H*W + 2*pad)

    acc = None
    tap = 0
    for dh in (-1, 0, 1):
        for dw in (-1, 0, 1):
            off = pad + dh * width + dw
            win = yp[:, off:off + hw]                             # (C_out, H*W)
            win = win * mask_ref[pl.ds(tap, 1), :]                # mask invalid taps to 0
            if acc is None:
                acc = win
            elif is_max:
                acc = jnp.maximum(acc, win)
            else:
                acc = acc + win
            tap += 1
    if not is_max:
        acc = acc * (1.0 / 9.0)   # AvgPool2d default: count_include_pad=True -> /9

    o_ref[0] = acc.astype(o_ref.dtype)


def pool_branch_pallas(x, conv_w, bn_gamma, bn_beta, bn_mean, bn_var,
                       avg_or_max, *, eps=1e-5):
    """PoolBranch forward.

    Args:
      x: (N, C_in, H, W) NCHW input (PyTorch layout).
      conv_w: (C_out, C_in) 1x1 conv weight (kernel dims squeezed), no bias.
      bn_gamma, bn_beta, bn_mean, bn_var: (C_out,) BatchNorm2d parameters /
        running statistics (inference-mode fold).
      avg_or_max: 'avg' or 'max'.

    Returns:
      (N, C_out, H, W) output, same semantics as PoolBranch.forward (eval mode).
    """
    if avg_or_max not in ("avg", "max"):
        raise ValueError("Unknown pool {}".format(avg_or_max))
    n, c_in, h, w = x.shape
    c_out = conv_w.shape[0]

    # Fold inference BatchNorm into the 1x1 conv.
    scale = bn_gamma / jnp.sqrt(bn_var + eps)
    w_f = (conv_w * scale[:, None]).astype(jnp.float32)              # (C_out, C_in)
    b_f = (bn_beta - bn_mean * scale).astype(jnp.float32).reshape(c_out, 1)

    # Per-tap validity masks for the 3x3/s1/p1 window, flattened over (h, w).
    hh = jnp.arange(h)[:, None]
    ww = jnp.arange(w)[None, :]
    taps = []
    for dh in (-1, 0, 1):
        for dw in (-1, 0, 1):
            valid = ((hh + dh >= 0) & (hh + dh < h) &
                     (ww + dw >= 0) & (ww + dw < w))
            taps.append(valid.reshape(h * w))
    mask = jnp.stack(taps, axis=0).astype(jnp.float32)               # (9, H*W)

    x_flat = x.reshape(n, c_in, h * w)                               # lane-dense spatial

    kernel = functools.partial(_pool_branch_kernel, width=w,
                               is_max=(avg_or_max == "max"))
    out_flat = pl.pallas_call(
        kernel,
        out_shape=jax.ShapeDtypeStruct((n, c_out, h * w), x.dtype),
        grid_spec=pltpu.PrefetchScalarGridSpec(
            num_scalar_prefetch=0,
            grid=(n,),                                               # one image per step
            in_specs=[
                pl.BlockSpec((1, c_in, h * w), lambda i: (i, 0, 0)),
                pl.BlockSpec((c_out, c_in), lambda i: (0, 0)),       # grid-invariant
                pl.BlockSpec((c_out, 1), lambda i: (0, 0)),          # grid-invariant
                pl.BlockSpec((9, h * w), lambda i: (0, 0)),          # grid-invariant
            ],
            out_specs=pl.BlockSpec((1, c_out, h * w), lambda i: (i, 0, 0)),
        ),
        compiler_params=pltpu.CompilerParams(
            dimension_semantics=("parallel",),                       # v7x: 2 TCs share batch
        ),
    )(x_flat, w_f, b_f, mask)
    return out_flat.reshape(n, c_out, h, w)


def pool_branch_ref(x, conv_w, bn_gamma, bn_beta, bn_mean, bn_var,
                    avg_or_max, *, eps=1e-5):
    """Pure-JAX reference mirroring PoolBranch.forward (eval-mode BN)."""
    y = jnp.einsum("nchw,oc->nohw", x, conv_w,
                   precision=jax.lax.Precision.HIGHEST)
    scale = bn_gamma / jnp.sqrt(bn_var + eps)
    shift = bn_beta - bn_mean * scale
    y = y * scale[None, :, None, None] + shift[None, :, None, None]
    y = jnp.maximum(y, 0.0)
    n, c, h, w = y.shape
    pad_val = -jnp.inf if avg_or_max == "max" else 0.0
    yp = jnp.pad(y, ((0, 0), (0, 0), (1, 1), (1, 1)), constant_values=pad_val)
    wins = jnp.stack([yp[:, :, dh:dh + h, dw:dw + w]
                      for dh in range(3) for dw in range(3)], axis=0)
    if avg_or_max == "max":
        return jnp.max(wins, axis=0)
    return jnp.mean(wins, axis=0)   # count_include_pad=True -> divide by 9


if __name__ == "__main__":
    key = jax.random.PRNGKey(0)
    kx, kw, kg, kb, km, kv = jax.random.split(key, 6)

    batch, in_planes, out_planes, height, width = 2, 4, 8, 16, 16
    x = jax.random.normal(kx, (batch, in_planes, height, width), dtype=jnp.float32)
    conv_w = jax.random.normal(kw, (out_planes, in_planes), dtype=jnp.float32) * 0.3
    bn_gamma = 1.0 + 0.1 * jax.random.normal(kg, (out_planes,), dtype=jnp.float32)
    bn_beta = 0.1 * jax.random.normal(kb, (out_planes,), dtype=jnp.float32)
    bn_mean = 0.1 * jax.random.normal(km, (out_planes,), dtype=jnp.float32)
    bn_var = jax.random.uniform(kv, (out_planes,), dtype=jnp.float32,
                                minval=0.5, maxval=1.5)

    for mode in ("max", "avg"):
        out = pool_branch_pallas(x, conv_w, bn_gamma, bn_beta, bn_mean, bn_var, mode)
        out = jax.block_until_ready(out)
        ref = pool_branch_ref(x, conv_w, bn_gamma, bn_beta, bn_mean, bn_var, mode)
        assert out.shape == (batch, out_planes, height, width)
        # 1e-4 tolerance covers MXU-vs-XLA f32 matmul pass differences; any
        # structural bug (wrong tap/mask/fold) produces O(0.1+) errors.
        assert jnp.allclose(out, ref, atol=1e-4, rtol=1e-4), \
            "mismatch vs reference ({})".format(mode)

    print("KERNEL_OK")
</pallas_src>

<mosaic_0001>
module attributes {stable_mosaic.version = 11 : i64} {
  func.func @_pool_branch_kernel(%arg0: i32, %arg1: memref<1x4x256xf32, #tpu.memory_space<vmem>>, %arg2: memref<8x4xf32, #tpu.memory_space<vmem>>, %arg3: memref<8x1xf32, #tpu.memory_space<vmem>>, %arg4: memref<9x256xf32, #tpu.memory_space<vmem>>, %arg5: memref<1x8x256xf32, #tpu.memory_space<vmem>>) attributes {dimension_semantics = [#tpu.dimension_semantics<parallel>], iteration_bounds = array<i64: 2>, scalar_prefetch = 0 : i64, scratch_operands = 0 : i64, tpu.core_type = #tpu.core_type<tc>, window_params = [{transform_indices = @transform_0, window_bounds = array<i64: 1, 4, 256>}, {pipeline_mode = #tpu.pipeline_mode<synchronous>, transform_indices = @transform_1, window_bounds = array<i64: 8, 4>}, {pipeline_mode = #tpu.pipeline_mode<synchronous>, transform_indices = @transform_2, window_bounds = array<i64: 8, 1>}, {pipeline_mode = #tpu.pipeline_mode<synchronous>, transform_indices = @transform_3, window_bounds = array<i64: 9, 256>}, {transform_indices = @transform_4, window_bounds = array<i64: 1, 8, 256>}]} {
    %c0 = arith.constant 0 : index
    %c0_0 = arith.constant 0 : index
    %c0_1 = arith.constant 0 : index
    %0 = vector.load %arg1[%c0, %c0_0, %c0_1] : memref<1x4x256xf32, #tpu.memory_space<vmem>>, vector<1x4x256xf32>
    %1 = vector.shape_cast %0 : vector<1x4x256xf32> to vector<4x256xf32>
    %c0_2 = arith.constant 0 : index
    %c0_3 = arith.constant 0 : index
    %2 = vector.load %arg2[%c0_2, %c0_3] : memref<8x4xf32, #tpu.memory_space<vmem>>, vector<8x4xf32>
    %cst = arith.constant dense<0.000000e+00> : vector<8x256xf32>
    %3 = tpu.matmul %2, %1, %cst {dimension_numbers = #tpu.dot_dimension_numbers<[1], [0], [0], [1], [0, 0, 1, 1], [], []>} : vector<8x4xf32>, vector<4x256xf32>, vector<8x256xf32> -> vector<8x256xf32>
    %c0_4 = arith.constant 0 : index
    %c0_5 = arith.constant 0 : index
    %4 = vector.load %arg3[%c0_4, %c0_5] : memref<8x1xf32, #tpu.memory_space<vmem>>, vector<8x1xf32>
    %5 = vector.broadcast %4 : vector<8x1xf32> to vector<8x256xf32>
    %6 = arith.addf %3, %5 : vector<8x256xf32>
    %cst_6 = arith.constant 0.000000e+00 : f32
    %7 = vector.broadcast %cst_6 : f32 to vector<8x256xf32>
    %8 = arith.maximumf %6, %7 : vector<8x256xf32>
    %cst_7 = arith.constant 0.000000e+00 : f32
    %9 = vector.broadcast %cst_7 : f32 to vector<8x128xf32>
    %10 = tpu.concatenate %9, %8, %9 in 1 : vector<8x128xf32>, vector<8x256xf32>, vector<8x128xf32> -> vector<8x512xf32>
    %11 = vector.extract_strided_slice %10 {offsets = [0, 111], sizes = [8, 256], strides = [1, 1]} : vector<8x512xf32> to vector<8x256xf32>
    %c0_8 = arith.constant 0 : index
    %c0_9 = arith.constant 0 : index
    %12 = vector.load %arg4[%c0_8, %c0_9] : memref<9x256xf32, #tpu.memory_space<vmem>>, vector<1x256xf32>
    %13 = vector.broadcast %12 : vector<1x256xf32> to vector<8x256xf32>
    %14 = arith.mulf %11, %13 : vector<8x256xf32>
    %15 = vector.extract_strided_slice %10 {offsets = [0, 112], sizes = [8, 256], strides = [1, 1]} : vector<8x512xf32> to vector<8x256xf32>
    %c1 = arith.constant 1 : index
    %c0_10 = arith.constant 0 : index
    %16 = vector.load %arg4[%c1, %c0_10] : memref<9x256xf32, #tpu.memory_space<vmem>>, vector<1x256xf32>
    %17 = vector.broadcast %16 : vector<1x256xf32> to vector<8x256xf32>
    %18 = arith.mulf %15, %17 : vector<8x256xf32>
    %19 = arith.maximumf %14, %18 : vector<8x256xf32>
    %20 = vector.extract_strided_slice %10 {offsets = [0, 113], sizes = [8, 256], strides = [1, 1]} : vector<8x512xf32> to vector<8x256xf32>
    %c2 = arith.constant 2 : index
    %c0_11 = arith.constant 0 : index
    %21 = vector.load %arg4[%c2, %c0_11] : memref<9x256xf32, #tpu.memory_space<vmem>>, vector<1x256xf32>
    %22 = vector.broadcast %21 : vector<1x256xf32> to vector<8x256xf32>
    %23 = arith.mulf %20, %22 : vector<8x256xf32>
    %24 = arith.maximumf %19, %23 : vector<8x256xf32>
    %25 = vector.extract_strided_slice %10 {offsets = [0, 127], sizes = [8, 256], strides = [1, 1]} : vector<8x512xf32> to vector<8x256xf32>
    %c3 = arith.constant 3 : index
    %c0_12 = arith.constant 0 : index
    %26 = vector.load %arg4[%c3, %c0_12] : memref<9x256xf32, #tpu.memory_space<vmem>>, vector<1x256xf32>
    %27 = vector.broadcast %26 : vector<1x256xf32> to vector<8x256xf32>
    %28 = arith.mulf %25, %27 : vector<8x256xf32>
    %29 = arith.maximumf %24, %28 : vector<8x256xf32>
    %30 = vector.extract_strided_slice %10 {offsets = [0, 128], sizes = [8, 256], strides = [1, 1]} : vector<8x512xf32> to vector<8x256xf32>
    %c4 = arith.constant 4 : index
    %c0_13 = arith.constant 0 : index
    %31 = vector.load %arg4[%c4, %c0_13] : memref<9x256xf32, #tpu.memory_space<vmem>>, vector<1x256xf32>
    %32 = vector.broadcast %31 : vector<1x256xf32> to vector<8x256xf32>
    %33 = arith.mulf %30, %32 : vector<8x256xf32>
    %34 = arith.maximumf %29, %33 : vector<8x256xf32>
    %35 = vector.extract_strided_slice %10 {offsets = [0, 129], sizes = [8, 256], strides = [1, 1]} : vector<8x512xf32> to vector<8x256xf32>
    %c5 = arith.constant 5 : index
    %c0_14 = arith.constant 0 : index
    %36 = vector.load %arg4[%c5, %c0_14] : memref<9x256xf32, #tpu.memory_space<vmem>>, vector<1x256xf32>
    %37 = vector.broadcast %36 : vector<1x256xf32> to vector<8x256xf32>
    %38 = arith.mulf %35, %37 : vector<8x256xf32>
    %39 = arith.maximumf %34, %38 : vector<8x256xf32>
    %40 = vector.extract_strided_slice %10 {offsets = [0, 143], sizes = [8, 256], strides = [1, 1]} : vector<8x512xf32> to vector<8x256xf32>
    %c6 = arith.constant 6 : index
    %c0_15 = arith.constant 0 : index
    %41 = vector.load %arg4[%c6, %c0_15] : memref<9x256xf32, #tpu.memory_space<vmem>>, vector<1x256xf32>
    %42 = vector.broadcast %41 : vector<1x256xf32> to vector<8x256xf32>
    %43 = arith.mulf %40, %42 : vector<8x256xf32>
    %44 = arith.maximumf %39, %43 : vector<8x256xf32>
    %45 = vector.extract_strided_slice %10 {offsets = [0, 144], sizes = [8, 256], strides = [1, 1]} : vector<8x512xf32> to vector<8x256xf32>
    %c7 = arith.constant 7 : index
    %c0_16 = arith.constant 0 : index
    %46 = vector.load %arg4[%c7, %c0_16] : memref<9x256xf32, #tpu.memory_space<vmem>>, vector<1x256xf32>
    %47 = vector.broadcast %46 : vector<1x256xf32> to vector<8x256xf32>
    %48 = arith.mulf %45, %47 : vector<8x256xf32>
    %49 = arith.maximumf %44, %48 : vector<8x256xf32>
    %50 = vector.extract_strided_slice %10 {offsets = [0, 145], sizes = [8, 256], strides = [1, 1]} : vector<8x512xf32> to vector<8x256xf32>
    %c8 = arith.constant 8 : index
    %c0_17 = arith.constant 0 : index
    %51 = vector.load %arg4[%c8, %c0_17] : memref<9x256xf32, #tpu.memory_space<vmem>>, vector<1x256xf32>
    %52 = vector.broadcast %51 : vector<1x256xf32> to vector<8x256xf32>
    %53 = arith.mulf %50, %52 : vector<8x256xf32>
    %54 = arith.maximumf %49, %53 : vector<8x256xf32>
    %c0_18 = arith.constant 0 : index
    %c0_19 = arith.constant 0 : index
    %c0_20 = arith.constant 0 : index
    %55 = vector.load %arg5[%c0_18, %c0_19, %c0_20] : memref<1x8x256xf32, #tpu.memory_space<vmem>>, vector<1x8x256xf32>
    %56 = vector.shape_cast %55 : vector<1x8x256xf32> to vector<8x256xf32>
    %57 = vector.shape_cast %54 : vector<8x256xf32> to vector<1x8x256xf32>
    tpu.vector_store %arg5[%c0_18, %c0_19, %c0_20], %57 {strides = array<i32>} : memref<1x8x256xf32, #tpu.memory_space<vmem>>, vector<1x8x256xf32>,
    return
  }
  func.func @transform_0(%arg0: i32) -> (i32, i32, i32) {
    %c0_i32 = arith.constant 0 : i32
    %c0_i32_0 = arith.constant 0 : i32
    %c0_i32_1 = arith.constant 0 : i32
    return %arg0, %c0_i32, %c0_i32_0 : i32, i32, i32
  }
  func.func @transform_1(%arg0: i32) -> (i32, i32) {
    %c0_i32 = arith.constant 0 : i32
    %c0_i32_0 = arith.constant 0 : i32
    %c0_i32_1 = arith.constant 0 : i32
    return %c0_i32, %c0_i32_0 : i32, i32
  }
  func.func @transform_2(%arg0: i32) -> (i32, i32) {
    %c0_i32 = arith.constant 0 : i32
    %c0_i32_0 = arith.constant 0 : i32
    %c0_i32_1 = arith.constant 0 : i32
    return %c0_i32, %c0_i32_0 : i32, i32
  }
  func.func @transform_3(%arg0: i32) -> (i32, i32) {
    %c0_i32 = arith.constant 0 : i32
    %c0_i32_0 = arith.constant 0 : i32
    %c0_i32_1 = arith.constant 0 : i32
    return %c0_i32, %c0_i32_0 : i32, i32
  }
  func.func @transform_4(%arg0: i32) -> (i32, i32, i32) {
    %c0_i32 = arith.constant 0 : i32
    %c0_i32_0 = arith.constant 0 : i32
    %c0_i32_1 = arith.constant 0 : i32
    return %arg0, %c0_i32, %c0_i32_0 : i32, i32, i32
  }
}

</mosaic_0001>

<llo_original>
// kernel: tpu_custom_call.1
$region0: #{tpu_custom_call.1}
  #allocation0 [shape = 'u32[]', space=smem, size = 0x4, offset = 0x4, fixed_abs, tag = 'smem constant byte address 0x4 - core index']
  #allocation1 [shape = 'u32[144,128]{1,0:T(1,128)}', space=vmem, size = 0x12000, scoped, tag = 'internal scratch']
  %s0 = inlined_call_operand.hbm [shape: f32[2,4,256], index: 0, kind: input, shape index: {}]
  %s1 = inlined_call_operand.vmem [shape: f32[8,4], index: 1, kind: input, shape index: {}]
  %s2 = inlined_call_operand.vmem [shape: f32[8,1], index: 2, kind: input, shape index: {}]
  %s3 = inlined_call_operand.vmem [shape: f32[9,256], index: 3, kind: input, shape index: {}]
  %s4 = inlined_call_operand.hbm [shape: f32[2,8,256], index: 4, kind: output, shape index: {}]
  %s5 = sld [smem:[#allocation0]]
  $region53: #{tpu_custom_call.1} parent=0
    _
  %s7 = ssub.s32 1, %s5
  %s8 = scalar_select 0, %s7, %s5
  $region1: #{tpu_custom_call.1} parent=0
    #allocation2 [shape = 'u8[8192]{0}', space=vmem, size = 0x2000, scoped, tag = 'input window, operand 0']
    #allocation3 [shape = 's32[2]{0}', space=sflag, size = 0x8, scoped, tag = 'scoped memory for tpu_custom_call.1']
    #allocation4 [shape = 's32[2]{0}', space=sflag, size = 0x8, scoped, tag = 'scoped memory for tpu_custom_call.1']
    #allocation5 [shape = 'u8[16384]{0}', space=vmem, size = 0x4000, scoped, tag = 'output window, operand 0']
    %9 = vsyncpa [#allocation3], 0
    %s10 = scalar_lea.sflag [#allocation3], 1
    %11 = vsyncpa %s10, 0
    %12 = vsyncpa [#allocation4], 0
    %s13 = scalar_lea.sflag [#allocation4], 1
    %14 = vsyncpa %s13, 0
    loop: start=0, step=1, limit=4
    $region2: #{tpu_custom_call.1} parent=1 // loop_pre_header
      _
    $region3: #{tpu_custom_call.1} parent=1 // loop_header
      %s16 = sphi 0, %s20
      %p17 = scmp.ge.s32.totalorder %s16, 4
      %s26 = sphi 0, %s28
      %s29 = sphi 0, %s26
      %s30 = sphi 0, %s29
      %s46 = sphi 0, %s30
      %s50 = sphi 0, %s50
      %s52 = sphi 0, %s50
      %s53 = sphi 0, %s52
      %s67 = sphi 0, %s53
      %s71 = sphi 0, %s71
      %s73 = sphi 0, %s71
      %s74 = sphi 0, %s73
      %s88 = sphi 0, %s74
      %s92 = sphi 0, %s92
      %s94 = sphi 0, %s92
      %s95 = sphi 0, %s94
      %s109 = sphi 0, %s95
      %s115 = sphi 0, %s117
      %s118 = sphi 0, %s115
      %s119 = sphi 0, %s118
      %s135 = sphi 0, %s119
    $region4: #{tpu_custom_call.1} parent=1 // loop_header_branch
      %19 = sbr.rel (%p17) target = $region8
    $region5: #{tpu_custom_call.1} parent=1 // loop_body
      %s21 = ssub.s32 %s16, 1
      %s22 = ssub.s32 %s16, 2
      %s23 = sadd.s32 %s16, 1
      %s24 = ssub.s32 %s16, %s23
      %p25 = scmp.eq.s32.totalorder %s24, 0
      %s27 = sadd.s32 %s26, 1
      %s28 = scalar_select %p25, %s26, %s27
      %p31 = pneg %p25
      %p32 = scmp.eq.s32.totalorder %s16, 1
      %p33 = por %p31, %p32
      %p34 = scmp.ne.s32.totalorder %s26, %s29
      %p35 = scmp.eq.s32.totalorder %s16, 0
      %p36 = por %p34, %p35
      %p37 = scmp.ne.s32.totalorder %s26, %s29
      %p38 = scmp.eq.s32.totalorder %s21, 1
      %p39 = por %p37, %p38
      %p40 = scmp.ne.s32.totalorder %s29, %s30
      %p41 = scmp.eq.s32.totalorder %s21, 0
      %p42 = por %p40, %p41
      %p43 = scmp.ne.s32.totalorder %s29, %s30
      %p44 = scmp.eq.s32.totalorder %s22, 1
      %p45 = por %p43, %p44
      %p47 = scmp.ne.s32.totalorder %s30, %s46
      %p48 = scmp.eq.s32.totalorder %s22, 0
      %p49 = por %p47, %p48
      %s51 = sadd.s32 %s50, 1
      %p54 = scmp.eq.s32.totalorder %s16, 1
      %p55 = scmp.ne.s32.totalorder %s50, %s52
      %p56 = scmp.eq.s32.totalorder %s16, 0
      %p57 = por %p55, %p56
      %p58 = scmp.ne.s32.totalorder %s50, %s52
      %p59 = scmp.eq.s32.totalorder %s21, 1
      %p60 = por %p58, %p59
      %p61 = scmp.ne.s32.totalorder %s52, %s53
      %p62 = scmp.eq.s32.totalorder %s21, 0
      %p63 = por %p61, %p62
      %p64 = scmp.ne.s32.totalorder %s52, %s53
      %p65 = scmp.eq.s32.totalorder %s22, 1
      %p66 = por %p64, %p65
      %p68 = scmp.ne.s32.totalorder %s53, %s67
      %p69 = scmp.eq.s32.totalorder %s22, 0
      %p70 = por %p68, %p69
      %s72 = sadd.s32 %s71, 1
      %p75 = scmp.eq.s32.totalorder %s16, 1
      %p76 = scmp.ne.s32.totalorder %s71, %s73
      %p77 = scmp.eq.s32.totalorder %s16, 0
      %p78 = por %p76, %p77
      %p79 = scmp.ne.s32.totalorder %s71, %s73
      %p80 = scmp.eq.s32.totalorder %s21, 1
      %p81 = por %p79, %p80
      %p82 = scmp.ne.s32.totalorder %s73, %s74
      %p83 = scmp.eq.s32.totalorder %s21, 0
      %p84 = por %p82, %p83
      %p85 = scmp.ne.s32.totalorder %s73, %s74
      %p86 = scmp.eq.s32.totalorder %s22, 1
      %p87 = por %p85, %p86
      %p89 = scmp.ne.s32.totalorder %s74, %s88
      %p90 = scmp.eq.s32.totalorder %s22, 0
      %p91 = por %p89, %p90
      %s93 = sadd.s32 %s92, 1
      %p96 = scmp.eq.s32.totalorder %s16, 1
      %p97 = scmp.ne.s32.totalorder %s92, %s94
      %p98 = scmp.eq.s32.totalorder %s16, 0
      %p99 = por %p97, %p98
      %p100 = scmp.ne.s32.totalorder %s92, %s94
      %p101 = scmp.eq.s32.totalorder %s21, 1
      %p102 = por %p100, %p101
      %p103 = scmp.ne.s32.totalorder %s94, %s95
      %p104 = scmp.eq.s32.totalorder %s21, 0
      %p105 = por %p103, %p104
      %p106 = scmp.ne.s32.totalorder %s94, %s95
      %p107 = scmp.eq.s32.totalorder %s22, 1
      %p108 = por %p106, %p107
      %p110 = scmp.ne.s32.totalorder %s95, %s109
      %p111 = scmp.eq.s32.totalorder %s22, 0
      %p112 = por %p110, %p111
      %s113 = ssub.s32 %s16, %s23
      %p114 = scmp.eq.s32.totalorder %s113, 0
      %s116 = sadd.s32 %s115, 1
      %s117 = scalar_select %p114, %s115, %s116
      %p120 = pneg %p114
      %p121 = scmp.eq.s32.totalorder %s16, 1
      %p122 = por %p120, %p121
      %p123 = scmp.ne.s32.totalorder %s115, %s118
      %p124 = scmp.eq.s32.totalorder %s16, 0
      %p125 = por %p123, %p124
      %p126 = scmp.ne.s32.totalorder %s115, %s118
      %p127 = scmp.eq.s32.totalorder %s21, 1
      %p128 = por %p126, %p127
      %p129 = scmp.ne.s32.totalorder %s118, %s119
      %p130 = scmp.eq.s32.totalorder %s21, 0
      %p131 = por %p129, %p130
      %p132 = scmp.ne.s32.totalorder %s118, %s119
      %p133 = scmp.eq.s32.totalorder %s22, 1
      %p134 = por %p132, %p133
      %p136 = scmp.ne.s32.totalorder %s119, %s135
      %p137 = scmp.eq.s32.totalorder %s22, 0
      %p138 = por %p136, %p137
      %p139 = scmp.le.s32.totalorder 1, %s16
      %p140 = scmp.lt.s32.totalorder %s16, 3
      %p141 = pnand %p139, %p140
      %p142 = pneg %p141
      // Predicated region
      $region9: #{tpu_custom_call.1} parent=5 // pred_check
        _
      $region10: #{tpu_custom_call.1} parent=5 // pred_check_branch
        %144 = sbr.rel (%p141) target = $region12
      $region11: #{tpu_custom_call.1} parent=5 // pred_region
        %s145 = ssub.s32 %s16, 1
        // Predicated region
        $region13: #{tpu_custom_call.1} parent=11 // pred_check
          %p146 = pneg %p63
        $region14: #{tpu_custom_call.1} parent=11 // pred_check_branch
          %148 = sbr.rel (%p146) target = $region16
        $region15: #{tpu_custom_call.1} parent=11 // pred_region
          _
        $region16: #{tpu_custom_call.1} parent=11 // pred_fallthru
          _
        // Predicated region
        $region17: #{tpu_custom_call.1} parent=11 // pred_check
          %p149 = pneg %p84
        $region18: #{tpu_custom_call.1} parent=11 // pred_check_branch
          %151 = sbr.rel (%p149) target = $region20
        $region19: #{tpu_custom_call.1} parent=11 // pred_region
          _
        $region20: #{tpu_custom_call.1} parent=11 // pred_fallthru
          _
        // Predicated region
        $region21: #{tpu_custom_call.1} parent=11 // pred_check
          %p152 = pneg %p105
        $region22: #{tpu_custom_call.1} parent=11 // pred_check_branch
          %154 = sbr.rel (%p152) target = $region24
        $region23: #{tpu_custom_call.1} parent=11 // pred_region
          _
        $region24: #{tpu_custom_call.1} parent=11 // pred_fallthru
          _
      $region12: #{tpu_custom_call.1} parent=5 // pred_fallthru
        _
      %p155 = scmp.lt.s32.totalorder %s16, 2
      // Predicated region
      $region25: #{tpu_custom_call.1} parent=5 // pred_check
        %p156 = pneg %p155
      $region26: #{tpu_custom_call.1} parent=5 // pred_check_branch
        %158 = sbr.rel (%p156) target = $region28
      $region27: #{tpu_custom_call.1} parent=5 // pred_region
        // Predicated region
        $region29: #{tpu_custom_call.1} parent=27 // pred_check
          %p159 = pneg %p36
        $region30: #{tpu_custom_call.1} parent=27 // pred_check_branch
          %161 = sbr.rel (%p159) target = $region32
        $region31: #{tpu_custom_call.1} parent=27 // pred_region
          %s162 = sand.u32 %s26, 1
          %s163 = scalar_lea.sflag [#allocation3], %s162
          %s164 = sand.u32 %s26, 1
          %s165 = smul.addr %s164, 8
          %s166 = scalar_lea.vmem [#allocation2], %s165
          %s168 = ssub.s32 128, 128
          %169 = vsyncadd %s163, %s168
          %s170 = smul.addr %s16, 2
          %s171 = smul.addr %s170, 64
          %s172 = scalar_lea.hbm %s0, %s171
          %s174 = sshll.u32 %s166, 4
          %s175 = int_to_ptr.vmem [resolvable:$true] %s174
          %177 = dma.hbm_to_vmem [thread:$0]  %s172, 128, %s175, %s163
        $region32: #{tpu_custom_call.1} parent=27 // pred_fallthru
          _
      $region28: #{tpu_custom_call.1} parent=5 // pred_fallthru
        _
      %p178 = scmp.le.s32.totalorder 1, %s16
      %p179 = scmp.lt.s32.totalorder %s16, 3
      %p180 = pnand %p178, %p179
      %p181 = pneg %p180
      // Predicated region
      $region33: #{tpu_custom_call.1} parent=5 // pred_check
        _
      $region34: #{tpu_custom_call.1} parent=5 // pred_check_branch
        %183 = sbr.rel (%p180) target = $region36
      $region35: #{tpu_custom_call.1} parent=5 // pred_region
        %s184 = ssub.s32 %s16, 1
        %s185 = sand.u32 %s29, 1
        %s186 = scalar_lea.sflag [#allocation3], %s185
        %s187 = sand.u32 %s29, 1
        %s188 = smul.addr %s187, 8
        %s189 = scalar_lea.vmem [#allocation2], %s188
        // Predicated region
        $region37: #{tpu_custom_call.1} parent=35 // pred_check
          %p190 = pneg %p42
        $region38: #{tpu_custom_call.1} parent=35 // pred_check_branch
          %192 = sbr.rel (%p190) target = $region40
        $region39: #{tpu_custom_call.1} parent=35 // pred_region
          %193 = dma.done %s186, 128
        $region40: #{tpu_custom_call.1} parent=35 // pred_fallthru
          _
        %s194 = sand.u32 %s29, 1
        %s195 = scalar_lea.sflag [#allocation3], %s194
        %s196 = sand.u32 %s29, 1
        %s197 = smul.addr %s196, 8
        %s198 = scalar_lea.vmem [#allocation2], %s197
        %p199 = pneg %p42
        %p200 = pneg %p39
        %p201 = pneg %p63
        %p202 = pneg %p60
        %p203 = pneg %p84
        %p204 = pneg %p81
        %p205 = pneg %p105
        %p206 = pneg %p102
        %p207 = pneg %p131
        %p208 = pneg %p128
        %s209 = sand.u32 %s118, 1
        %s210 = scalar_lea.sflag [#allocation4], %s209
        %s211 = sand.u32 %s118, 1
        %s212 = smul.addr %s211, 16
        %s213 = scalar_lea.vmem [#allocation5], %s212
        %v214 = vld [vmem:[%s189] sm:$0xff]
        %v215 = vld [vmem:[%s1] sm:$0xff]
        %v216 = vld [vmem:[%s2] sm:$0xff]
        %218 = vset.pattern.permute.xlu0 0
        %219 = vperm.xlu0 %218, %v216
        %v220 = vpop.permute.xlu0 %219
        %v223 = vcombine.high %v214, %v214
        %vm224 = vcmask 31744
        %v226 = vsel %vm224, %v215, 0
        %vm228 = vcmask 1043456
        %v229 = vsel %vm228, %v214, 0
        %v231 = vsel %vm228, %v223, 0
        %233 = vmatprep.subr.mxu0 %v231
        %234 = vmatpush1.msra.mxu0 %v229
        %235 = vmatprep.subr.mxu0 0.0
        %236 = vmatpush1.msra.mxu0 0.0
        %237 = vmatprep.subr.mxu0 0.0
        %238 = vmatpush1.msra.mxu0 0.0
        %239 = vmatprep.subr.mxu0 0.0
        %240 = vmatpush1.msra.mxu0 0.0
        %241 = vmatprep.subr.mxu0 0.0
        %242 = vmatpush1.msra.mxu0 0.0
        %243 = vmatprep.subr.mxu0 0.0
        %244 = vmatpush1.msra.mxu0 0.0
        %245 = vmatprep.subr.mxu0 0.0
        %246 = vmatpush1.msra.mxu0 0.0
        %247 = vmatprep.subr.mxu0 0.0
        %248 = vmatpush1.msra.mxu0 0.0
        %249 = vmatprep.subr.mxu0 0.0
        %250 = vmatpush1.msra.mxu0 0.0
        %251 = vmatprep.subr.mxu0 0.0
        %252 = vmatpush1.msra.mxu0 0.0
        %253 = vmatprep.subr.mxu0 0.0
        %254 = vmatpush1.msra.mxu0 0.0
        %255 = vmatprep.subr.mxu0 0.0
        %256 = vmatpush1.msra.mxu0 0.0
        %257 = vmatprep.subr.mxu0 0.0
        %258 = vmatpush1.msra.mxu0 0.0
        %259 = vmatprep.subr.mxu0 0.0
        %260 = vmatpush1.msra.mxu0 0.0
        %261 = vmatprep.subr.mxu0 0.0
        %262 = vmatpush1.msra.mxu0 0.0
        %263 = vmatprep.subr.mxu0 0.0
        %264 = vmatpush1.msra.mxu0 0.0
        %265 = vmatprep.subr.mxu0 0.0
        %266 = vmatpush1.msra.mxu0 0.0
        %267 = vmatprep.subr.mxu0 0.0
        %268 = vmatpush1.msra.mxu0 0.0
        %269 = vmatprep.subr.mxu0 0.0
        %270 = vmatpush1.msra.mxu0 0.0
        %271 = vmatprep.subr.mxu0 0.0
        %272 = vmatpush1.msra.mxu0 0.0
        %273 = vmatprep.subr.mxu0 0.0
        %274 = vmatpush1.msra.mxu0 0.0
        %275 = vmatprep.subr.mxu0 0.0
        %276 = vmatpush1.msra.mxu0 0.0
        %277 = vmatprep.subr.mxu0 0.0
        %278 = vmatpush1.msra.mxu0 0.0
        %279 = vmatprep.subr.mxu0 0.0
        %280 = vmatpush1.msra.mxu0 0.0
        %281 = vmatprep.subr.mxu0 0.0
        %282 = vmatpush1.msra.mxu0 0.0
        %283 = vmatprep.subr.mxu0 0.0
        %284 = vmatpush1.msra.mxu0 0.0
        %285 = vmatprep.subr.mxu0 0.0
        %286 = vmatpush1.msra.mxu0 0.0
        %287 = vmatprep.subr.mxu0 0.0
        %288 = vmatpush1.msra.mxu0 0.0
        %289 = vmatprep.subr.mxu0 0.0
        %290 = vmatpush1.msra.mxu0 0.0
        %291 = vmatprep.subr.mxu0 0.0
        %292 = vmatpush1.msra.mxu0 0.0
        %293 = vmatprep.subr.mxu0 0.0
        %294 = vmatpush1.msra.mxu0 0.0
        %295 = vmatprep.subr.mxu0 0.0
        %296 = vmatpush1.msra.mxu0 0.0
        %297 = vmatprep.mubr.f32.mxu0 0.0
        %298 = vmatmul.mubr.f32.gmra.mrb[0].mxu0 %v226
        %v299 = vpop.f32.mrb[0].mxu0
        %v300 = vadd.f32 %v220, %v299
        %v301 = vpop.f32.mrb[0].mxu0
        %v302 = vadd.f32 %v220, %v301
        %303 = vdwg.mxu0
        %v304 = vmax.f32 %v300, 0.0
        %v305 = vmax.f32 %v302, 0.0
        %v306 = vld [vmem:[%s3] ss:$8 sm:$0x3]
        %v308 = vlaneseq
        %v309 = vshrl.u32 %v308, 7
        %v310 = vsub.s32 0, %v309
        %v311 = vrot.slane %v306, %v310
        %v312 = vlaneseq
        %v313 = vshrl.u32 %v312, 7
        %v314 = vsub.s32 1, %v313
        %v315 = vrot.slane %v306, %v314
        %316 = vrot.lane.b32.xlu0 %v311, 111
        %v317 = vpop.permute.xlu0 %316
        %318 = vrot.lane.b32.xlu0 %v315, 111
        %v319 = vpop.permute.xlu0 %318
        %vm320 = vcmask 908288
        %v321 = vsel %vm320, %v317, %v319
        %v325 = vmul.f32 %v317, 0.0
        %v326 = vmul.f32 %v304, %v321
        %v327 = vmul.f32 %v305, %v319
        %s328 = scalar_lea.vmem %s3, 1
        %v329 = vld [vmem:[%s328] ss:$8 sm:$0x3]
        %v331 = vlaneseq
        %v332 = vshrl.u32 %v331, 7
        %v333 = vsub.s32 0, %v332
        %v334 = vrot.slane %v329, %v333
        %v335 = vlaneseq
        %v336 = vshrl.u32 %v335, 7
        %v337 = vsub.s32 1, %v336
        %v338 = vrot.slane %v329, %v337
        %339 = vrot.lane.b32.xlu0 %v334, 112
        %v340 = vpop.permute.xlu0 %339
        %341 = vrot.lane.b32.xlu0 %v338, 112
        %v342 = vpop.permute.xlu0 %341
        %vm343 = vcmask 916480
        %v344 = vsel %vm343, %v340, %v342
        %v348 = vmul.f32 %v340, 0.0
        %v349 = vmul.f32 %v304, %v344
        %v350 = vmul.f32 %v305, %v342
        %354 = vrot.lane.b32.xlu0 %v348, 127
        %v355 = vpop.permute.xlu0 %354
        %356 = vrot.lane.b32.xlu0 %v349, 127
        %v357 = vpop.permute.xlu0 %356
        %358 = vrot.lane.b32.xlu0 %v350, 127
        %v359 = vpop.permute.xlu0 %358
        %vm360 = vcmask 1039360
        %v361 = vsel %vm360, %v355, %v357
        %v362 = vsel %vm360, %v357, %v359
        %v366 = vmax.f32 %v325, %v361
        %v367 = vmax.f32 %v326, %v362
        %v368 = vmax.f32 %v327, %v359
        %s369 = scalar_lea.vmem %s3, 2
        %v370 = vld [vmem:[%s369] ss:$8 sm:$0x3]
        %v372 = vlaneseq
        %v373 = vshrl.u32 %v372, 7
        %v374 = vsub.s32 0, %v373
        %v375 = vrot.slane %v370, %v374
        %v376 = vlaneseq
        %v377 = vshrl.u32 %v376, 7
        %v378 = vsub.s32 1, %v377
        %v379 = vrot.slane %v370, %v378
        %380 = vrot.lane.b32.xlu0 %v375, 113
        %v381 = vpop.permute.xlu0 %380
        %382 = vrot.lane.b32.xlu0 %v379, 113
        %v383 = vpop.permute.xlu0 %382
        %vm384 = vcmask 924672
        %v385 = vsel %vm384, %v381, %v383
        %v389 = vmul.f32 %v381, 0.0
        %v390 = vmul.f32 %v304, %v385
        %v391 = vmul.f32 %v305, %v383
        %395 = vrot.lane.b32.xlu0 %v389, 126
        %v396 = vpop.permute.xlu0 %395
        %397 = vrot.lane.b32.xlu0 %v390, 126
        %v398 = vpop.permute.xlu0 %397
        %399 = vrot.lane.b32.xlu0 %v391, 126
        %v400 = vpop.permute.xlu0 %399
        %vm401 = vcmask 1031168
        %v402 = vsel %vm401, %v396, %v398
        %v403 = vsel %vm401, %v398, %v400
        %v407 = vmax.f32 %v366, %v402
        %v408 = vmax.f32 %v367, %v403
        %v409 = vmax.f32 %v368, %v400
        %s410 = scalar_lea.vmem %s3, 3
        %v411 = vld [vmem:[%s410] ss:$8 sm:$0x3]
        %v413 = vlaneseq
        %v414 = vshrl.u32 %v413, 7
        %v415 = vsub.s32 0, %v414
        %v416 = vrot.slane %v411, %v415
        %v417 = vlaneseq
        %v418 = vshrl.u32 %v417, 7
        %v419 = vsub.s32 1, %v418
        %v420 = vrot.slane %v411, %v419
        %421 = vrot.lane.b32.xlu0 %v416, 127
        %v422 = vpop.permute.xlu0 %421
        %423 = vrot.lane.b32.xlu0 %v420, 127
        %v424 = vpop.permute.xlu0 %423
        %v425 = vsel %vm360, %v422, %v424
        %v429 = vmul.f32 %v422, 0.0
        %v430 = vmul.f32 %v304, %v425
        %v431 = vmul.f32 %v305, %v424
        %435 = vrot.lane.b32.xlu0 %v429, 112
        %v436 = vpop.permute.xlu0 %435
        %437 = vrot.lane.b32.xlu0 %v430, 112
        %v438 = vpop.permute.xlu0 %437
        %439 = vrot.lane.b32.xlu0 %v431, 112
        %v440 = vpop.permute.xlu0 %439
        %v441 = vsel %vm343, %v436, %v438
        %v442 = vsel %vm343, %v438, %v440
        %v446 = vmax.f32 %v407, %v441
        %v447 = vmax.f32 %v408, %v442
        %v448 = vmax.f32 %v409, %v440
        %s449 = scalar_lea.vmem %s3, 4
        %v450 = vld [vmem:[%s449] ss:$8 sm:$0x3]
        %v452 = vlaneseq
        %v453 = vshrl.u32 %v452, 7
        %v454 = vsub.s32 0, %v453
        %v455 = vrot.slane %v450, %v454
        %v456 = vlaneseq
        %v457 = vshrl.u32 %v456, 7
        %v458 = vsub.s32 1, %v457
        %v459 = vrot.slane %v450, %v458
        %v462 = vmul.f32 %v304, %v455
        %v463 = vmul.f32 %v305, %v459
        %466 = vrot.lane.b32.xlu0 %v462, 111
        %v467 = vpop.permute.xlu0 %466
        %468 = vrot.lane.b32.xlu0 %v463, 111
        %v469 = vpop.permute.xlu0 %468
        %v470 = vsel %vm320, %v467, %v469
        %v474 = vmax.f32 %v446, %v467
        %v475 = vmax.f32 %v447, %v470
        %v476 = vmax.f32 %v448, %v469
        %s477 = scalar_lea.vmem %s3, 5
        %v478 = vld [vmem:[%s477] ss:$8 sm:$0x3]
        %v480 = vlaneseq
        %v481 = vshrl.u32 %v480, 7
        %v482 = vsub.s32 0, %v481
        %v483 = vrot.slane %v478, %v482
        %v484 = vlaneseq
        %v485 = vshrl.u32 %v484, 7
        %v486 = vsub.s32 1, %v485
        %v487 = vrot.slane %v478, %v486
        %488 = vrot.lane.b32.xlu0 %v483, 1
        %v489 = vpop.permute.xlu0 %488
        %490 = vrot.lane.b32.xlu0 %v487, 1
        %v491 = vpop.permute.xlu0 %490
        %vm492 = vcmask 7168
        %v493 = vsel %vm492, %v489, %v491
        %v497 = vmul.f32 %v304, %v489
        %v498 = vmul.f32 %v305, %v493
        %v499 = vmul.f32 %v491, 0.0
        %503 = vrot.lane.b32.xlu0 %v497, 110
        %v504 = vpop.permute.xlu0 %503
        %505 = vrot.lane.b32.xlu0 %v498, 110
        %v506 = vpop.permute.xlu0 %505
        %507 = vrot.lane.b32.xlu0 %v499, 110
        %v508 = vpop.permute.xlu0 %507
        %vm509 = vcmask 900096
        %v510 = vsel %vm509, %v504, %v506
        %v511 = vsel %vm509, %v506, %v508
        %v515 = vmax.f32 %v474, %v504
        %v516 = vmax.f32 %v475, %v510
        %v517 = vmax.f32 %v476, %v511
        %s518 = scalar_lea.vmem %s3, 6
        %v519 = vld [vmem:[%s518] ss:$8 sm:$0x3]
        %v521 = vlaneseq
        %v522 = vshrl.u32 %v521, 7
        %v523 = vsub.s32 0, %v522
        %v524 = vrot.slane %v519, %v523
        %v525 = vlaneseq
        %v526 = vshrl.u32 %v525, 7
        %v527 = vsub.s32 1, %v526
        %v528 = vrot.slane %v519, %v527
        %529 = vrot.lane.b32.xlu0 %v524, 15
        %v530 = vpop.permute.xlu0 %529
        %531 = vrot.lane.b32.xlu0 %v528, 15
        %v532 = vpop.permute.xlu0 %531
        %vm533 = vcmask 121856
        %v534 = vsel %vm533, %v530, %v532
        %v538 = vmul.f32 %v304, %v530
        %v539 = vmul.f32 %v305, %v534
        %v540 = vmul.f32 %v532, 0.0
        %544 = vrot.lane.b32.xlu0 %v538, 96
        %v545 = vpop.permute.xlu0 %544
        %546 = vrot.lane.b32.xlu0 %v539, 96
        %v547 = vpop.permute.xlu0 %546
        %548 = vrot.lane.b32.xlu0 %v540, 96
        %v549 = vpop.permute.xlu0 %548
        %vm550 = vcmask 785408
        %v551 = vsel %vm550, %v545, %v547
        %v552 = vsel %vm550, %v547, %v549
        %v556 = vmax.f32 %v515, %v545
        %v557 = vmax.f32 %v516, %v551
        %v558 = vmax.f32 %v517, %v552
        %s559 = scalar_lea.vmem %s3, 7
        %v560 = vld [vmem:[%s559] ss:$8 sm:$0x3]
        %v562 = vlaneseq
        %v563 = vshrl.u32 %v562, 7
        %v564 = vsub.s32 0, %v563
        %v565 = vrot.slane %v560, %v564
        %v566 = vlaneseq
        %v567 = vshrl.u32 %v566, 7
        %v568 = vsub.s32 1, %v567
        %v569 = vrot.slane %v560, %v568
        %570 = vrot.lane.b32.xlu0 %v565, 16
        %v571 = vpop.permute.xlu0 %570
        %572 = vrot.lane.b32.xlu0 %v569, 16
        %v573 = vpop.permute.xlu0 %572
        %vm574 = vcmask 130048
        %v575 = vsel %vm574, %v571, %v573
        %v579 = vmul.f32 %v304, %v571
        %v580 = vmul.f32 %v305, %v575
        %v581 = vmul.f32 %v573, 0.0
        %585 = vrot.lane.b32.xlu0 %v579, 95
        %v586 = vpop.permute.xlu0 %585
        %587 = vrot.lane.b32.xlu0 %v580, 95
        %v588 = vpop.permute.xlu0 %587
        %589 = vrot.lane.b32.xlu0 %v581, 95
        %v590 = vpop.permute.xlu0 %589
        %vm591 = vcmask 777216
        %v592 = vsel %vm591, %v586, %v588
        %v593 = vsel %vm591, %v588, %v590
        %v597 = vmax.f32 %v556, %v586
        %v598 = vmax.f32 %v557, %v592
        %v599 = vmax.f32 %v558, %v593
        %s600 = scalar_lea.vmem %s3, 16
        %v601 = vld [vmem:[%s600] ss:$8 sm:$0x3]
        %v603 = vlaneseq
        %v604 = vshrl.u32 %v603, 7
        %v605 = vsub.s32 0, %v604
        %v606 = vrot.slane %v601, %v605
        %v607 = vlaneseq
        %v608 = vshrl.u32 %v607, 7
        %v609 = vsub.s32 1, %v608
        %v610 = vrot.slane %v601, %v609
        %611 = vrot.lane.b32.xlu0 %v606, 17
        %v612 = vpop.permute.xlu0 %611
        %613 = vrot.lane.b32.xlu0 %v610, 17
        %v614 = vpop.permute.xlu0 %613
        %vm615 = vcmask 138240
        %v616 = vsel %vm615, %v612, %v614
        %v620 = vmul.f32 %v304, %v612
        %v621 = vmul.f32 %v305, %v616
        %v622 = vmul.f32 %v614, 0.0
        %626 = vrot.lane.b32.xlu0 %v620, 94
        %v627 = vpop.permute.xlu0 %626
        %628 = vrot.lane.b32.xlu0 %v621, 94
        %v629 = vpop.permute.xlu0 %628
        %630 = vrot.lane.b32.xlu0 %v622, 94
        %v631 = vpop.permute.xlu0 %630
        %vm632 = vcmask 769024
        %v633 = vsel %vm632, %v627, %v629
        %v634 = vsel %vm632, %v629, %v631
        %v638 = vmax.f32 %v597, %v627
        %v639 = vmax.f32 %v598, %v633
        %v640 = vmax.f32 %v599, %v634
        %644 = vrot.lane.b32.xlu0 %v638, 17
        %v645 = vpop.permute.xlu0 %644
        %646 = vrot.lane.b32.xlu0 %v639, 17
        %v647 = vpop.permute.xlu0 %646
        %648 = vrot.lane.b32.xlu0 %v640, 17
        %v649 = vpop.permute.xlu0 %648
        %v650 = vsel %vm615, %v645, %v647
        %v651 = vsel %vm615, %v647, %v649
        %654 = vst [vmem:[%s213] sm:$0xff] %v650
        %655 = vst [vmem:[%s213 + $0x8] sm:$0xff] %v651
        %s656 = sand.u32 %s118, 1
        %s657 = scalar_lea.sflag [#allocation4], %s656
        %s658 = sand.u32 %s118, 1
        %s659 = smul.addr %s658, 16
        %s660 = scalar_lea.vmem [#allocation5], %s659
        // Predicated region
        $region41: #{tpu_custom_call.1} parent=35 // pred_check
          %p661 = pneg %p128
        $region42: #{tpu_custom_call.1} parent=35 // pred_check_branch
          %663 = sbr.rel (%p661) target = $region44
        $region43: #{tpu_custom_call.1} parent=35 // pred_region
          %s665 = ssub.s32 256, 256
          %666 = vsyncadd %s657, %s665
          %s667 = smul.addr %s21, 2
          %s668 = smul.addr %s667, 128
          %s669 = scalar_lea.hbm %s4, %s668
          %s671 = sshll.u32 %s660, 4
          %s672 = int_to_ptr.vmem [resolvable:$true] %s671
          %674 = dma.vmem_to_hbm [thread:$0]  %s672, 256, %s669, %s657
        $region44: #{tpu_custom_call.1} parent=35 // pred_fallthru
          _
      $region36: #{tpu_custom_call.1} parent=5 // pred_fallthru
        _
      %p675 = scmp.le.s32.totalorder 2, %s16
      // Predicated region
      $region45: #{tpu_custom_call.1} parent=5 // pred_check
        %p676 = pneg %p675
      $region46: #{tpu_custom_call.1} parent=5 // pred_check_branch
        %678 = sbr.rel (%p676) target = $region48
      $region47: #{tpu_custom_call.1} parent=5 // pred_region
        %s679 = ssub.s32 %s16, 2
        // Predicated region
        $region49: #{tpu_custom_call.1} parent=47 // pred_check
          %p680 = pneg %p134
        $region50: #{tpu_custom_call.1} parent=47 // pred_check_branch
          %682 = sbr.rel (%p680) target = $region52
        $region51: #{tpu_custom_call.1} parent=47 // pred_region
          %s683 = sand.u32 %s119, 1
          %s684 = scalar_lea.sflag [#allocation4], %s683
          %s685 = sand.u32 %s119, 1
          %s686 = smul.addr %s685, 16
          %s687 = scalar_lea.vmem [#allocation5], %s686
          %688 = dma.done %s684, 256
        $region52: #{tpu_custom_call.1} parent=47 // pred_fallthru
          _
      $region48: #{tpu_custom_call.1} parent=5 // pred_fallthru
        _
    $region6: #{tpu_custom_call.1} parent=1 // loop_footer
      %s20 = sadd.s32 1, %s16
    $region7: #{tpu_custom_call.1} parent=1 // loop_footer_branch
      %15 = sbr.rel target = $region3
    $region8: #{tpu_custom_call.1} parent=1 // loop_exit
      _
    %689 = vsyncpa [#allocation3], 1
    %s690 = scalar_lea.sflag [#allocation3], 1
    %691 = vsyncpa %s690, 1
    %692 = vsyncpa [#allocation4], 1
    %s693 = scalar_lea.sflag [#allocation4], 1
    %694 = vsyncpa %s693, 1

</llo_original>
